<compile_context>
chip_gen: v7x
topology: tpu7x:2x2x1
jax: 0.10.0
libtpu: 0.0.40
codegen_flags: <defaults>
</compile_context>

<pallas_src>
import jax
import jax.numpy as jnp
from jax.experimental import pallas as pl
from jax.experimental.pallas import tpu as pltpu


def _round_up(n, m):
    return ((n + m - 1) // m) * m


# ----------------------------------------------------------------------------- kernel
def mlp_kernel(x_ref,
               w1_ref, b1_ref,
               w2_ref, b2_ref,
               w3_ref, b3_ref,
               w4_ref, b4_ref,
               w5_ref, b5_ref,
               out_ref):
    """Fused forward pass on one (tile_b, in_pad) batch tile.

    Activations/weights are bf16 (MXU-native); every matmul accumulates in f32 via
    preferred_element_type; biases are f32; output is written as bf16 (lane-dense).
    """
    def layer(h, w_ref, b_ref, relu):
        y = jnp.dot(h, w_ref[...], preferred_element_type=jnp.float32) + b_ref[...]
        if relu:
            y = jnp.maximum(y, 0.0).astype(jnp.bfloat16)
        return y

    h = x_ref[...]                        # bf16 (tile_b, in_pad)
    h = layer(h, w1_ref, b1_ref, True)    # -> 128
    h = layer(h, w2_ref, b2_ref, True)    # -> 256
    h = layer(h, w3_ref, b3_ref, True)    # -> 512
    h = layer(h, w4_ref, b4_ref, True)    # -> 128
    out_ref[...] = layer(h, w5_ref, b5_ref, False).astype(jnp.bfloat16)  # lane-padded logits


# ----------------------------------------------------------------------------- params
def init_params(key, input_dim, output_dim):
    """Deterministic f32 parameters matching the PyTorch module's shapes (as (in,out))."""
    dims = [input_dim, 128, 256, 512, 128, output_dim]
    params = []
    for i in range(5):
        key, wk, bk = jax.random.split(key, 3)
        fan_in, fan_out = dims[i], dims[i + 1]
        bound = 1.0 / jnp.sqrt(jnp.float32(fan_in))
        w = jax.random.uniform(wk, (fan_in, fan_out), jnp.float32, -bound, bound)
        b = jax.random.uniform(bk, (1, fan_out), jnp.float32, -bound, bound)
        params.append((w, b))
    return params


# ----------------------------------------------------------------------------- helpers
def _const_spec(shape):
    """Constant-index (VMEM-resident) BlockSpec; single-buffered when supported."""
    try:
        return pl.BlockSpec(shape, lambda i: (0, 0), pipeline_mode=pl.Buffered(1))
    except (TypeError, AttributeError):
        # Older Pallas without pipeline_mode / Buffered — fall back to the default.
        return pl.BlockSpec(shape, lambda i: (0, 0))


def _choose_tiling(batch, tile_b):
    """Pick (padded_batch, tile_b): tiles aligned to 16 rows (bf16 sublane pair),
    and >=2 grid steps whenever the batch allows it (v7x megacore split)."""
    b8 = _round_up(batch, 8)
    if b8 <= 8:
        return b8, b8                         # single tiny tile (full-array block)
    tb = min(tile_b, _round_up(b8, 16))
    half = _round_up((b8 + 1) // 2, 16)       # guarantee >=2 grid steps
    tb = max(min(tb, half), 16)
    return _round_up(b8, tb), tb


# ----------------------------------------------------------------------------- wrapper
def phone_price_forward(x, params, tile_b=256):
    batch, input_dim = x.shape
    output_dim = params[-1][0].shape[1]
    in_pad = _round_up(input_dim, 128)            # lane-dense input width
    out_pad = _round_up(output_dim, 128)          # lane-dense output width

    # ---- pack kernel operands: bf16 weights, f32 biases, zero-padded first/last layer
    flat = []
    for i, (w, b) in enumerate(params):
        if i == 0 and w.shape[0] != in_pad:
            w = jnp.pad(w, ((0, in_pad - w.shape[0]), (0, 0)))
        if i == len(params) - 1 and w.shape[1] != out_pad:
            w = jnp.pad(w, ((0, 0), (0, out_pad - w.shape[1])))
            b = jnp.pad(b, ((0, 0), (0, out_pad - b.shape[1])))
        flat.append(w.astype(jnp.bfloat16))
        flat.append(b.astype(jnp.float32))

    # ---- batch tiling ----
    padded_batch, tile_b = _choose_tiling(batch, tile_b)
    x_p = x.astype(jnp.bfloat16)
    x_p = jnp.pad(x_p, ((0, padded_batch - batch), (0, in_pad - input_dim)))
    grid = (padded_batch // tile_b,)

    # x/out advance with the grid; weights & biases use a constant block index so they
    # are DMA'd once, stay VMEM-resident, and are single-buffered (no pipeline copy).
    in_specs = [pl.BlockSpec((tile_b, in_pad), lambda i: (i, 0))]
    for op in flat:
        in_specs.append(_const_spec(op.shape))
    out_specs = pl.BlockSpec((tile_b, out_pad), lambda i: (i, 0))

    # ---- advisory cost estimate for the XLA scheduler ----
    dims = [in_pad] + [w.shape[1] for w, _ in params[:-1]] + [out_pad]
    flops = 2 * padded_batch * sum(dims[i] * dims[i + 1] for i in range(len(dims) - 1))
    bytes_accessed = (sum(int(op.size) * op.dtype.itemsize for op in flat)
                      + int(x_p.size) * 2            # bf16 input
                      + padded_batch * out_pad * 2)  # bf16 output

    out = pl.pallas_call(
        mlp_kernel,
        out_shape=jax.ShapeDtypeStruct((padded_batch, out_pad), jnp.bfloat16),
        grid=grid,
        in_specs=in_specs,
        out_specs=out_specs,
        compiler_params=pltpu.CompilerParams(
            dimension_semantics=("parallel",),
            vmem_limit_bytes=48 * 1024 * 1024),
        cost_estimate=pl.CostEstimate(
            flops=flops, transcendentals=0, bytes_accessed=bytes_accessed),
    )(x_p, *flat)

    return out[:batch, :output_dim].astype(jnp.float32)


# --------------------------------------------------------------------------- references
def reference_forward_f32(x, params):
    h = x
    for i, (w, b) in enumerate(params):
        h = h @ w + b
        if i < len(params) - 1:
            h = jnp.maximum(h, 0.0)
    return h


def reference_forward_bf16(x, params):
    """Pure-JAX reference mirroring the kernel's bf16-in / f32-accumulate / bf16-out numerics."""
    h = x.astype(jnp.bfloat16)
    for i, (w, b) in enumerate(params):
        h = jnp.dot(h, w.astype(jnp.bfloat16),
                    preferred_element_type=jnp.float32) + b
        if i < len(params) - 1:
            h = jnp.maximum(h, 0.0).astype(jnp.bfloat16)
    return h.astype(jnp.bfloat16).astype(jnp.float32)


# --------------------------------------------------------------------------------- main
if __name__ == "__main__":
    # Phone-price-classification problem: 20 features -> 4 price classes.
    INPUT_DIM, OUTPUT_DIM, BATCH = 20, 4, 8

    key = jax.random.PRNGKey(0)
    key, xk = jax.random.split(key)
    x = jax.random.normal(xk, (BATCH, INPUT_DIM), jnp.float32)

    params = init_params(key, INPUT_DIM, OUTPUT_DIM)

    # Small batch (grid=(1,), single full-array tile).
    out = jax.block_until_ready(phone_price_forward(x, params))
    assert out.shape == (BATCH, OUTPUT_DIM)
    ref_bf16 = reference_forward_bf16(x, params)
    assert jnp.allclose(out, ref_bf16, atol=1e-2, rtol=1e-2)
    ref_f32 = reference_forward_f32(x, params)
    assert jnp.allclose(out, ref_f32, atol=1e-1, rtol=1e-1)

    # Larger batch exercising the multi-tile path (tile_b=256, grid=(2,), megacore split).
    key, xk2 = jax.random.split(key)
    x_big = jax.random.normal(xk2, (512, INPUT_DIM), jnp.float32)
    out_big = jax.block_until_ready(phone_price_forward(x_big, params))
    assert out_big.shape == (512, OUTPUT_DIM)
    assert jnp.allclose(out_big, reference_forward_bf16(x_big, params), atol=1e-2, rtol=1e-2)

    print("KERNEL_OK")
</pallas_src>

<mosaic_0001>
module attributes {stable_mosaic.version = 11 : i64} {
  func.func @mlp_kernel(%arg0: i32, %arg1: memref<8x128xbf16, #tpu.memory_space<vmem>>, %arg2: memref<128x128xbf16, #tpu.memory_space<vmem>>, %arg3: memref<1x128xf32, #tpu.memory_space<vmem>>, %arg4: memref<128x256xbf16, #tpu.memory_space<vmem>>, %arg5: memref<1x256xf32, #tpu.memory_space<vmem>>, %arg6: memref<256x512xbf16, #tpu.memory_space<vmem>>, %arg7: memref<1x512xf32, #tpu.memory_space<vmem>>, %arg8: memref<512x128xbf16, #tpu.memory_space<vmem>>, %arg9: memref<1x128xf32, #tpu.memory_space<vmem>>, %arg10: memref<128x128xbf16, #tpu.memory_space<vmem>>, %arg11: memref<1x128xf32, #tpu.memory_space<vmem>>, %arg12: memref<8x128xbf16, #tpu.memory_space<vmem>>) attributes {dimension_semantics = [#tpu.dimension_semantics<parallel>], iteration_bounds = array<i64: 1>, scalar_prefetch = 0 : i64, scratch_operands = 0 : i64, tpu.core_type = #tpu.core_type<tc>, window_params = [{transform_indices = @transform_0, window_bounds = array<i64: 8, 128>}, {pipeline_mode = #tpu.pipeline_mode<synchronous>, transform_indices = @transform_1, window_bounds = array<i64: 128, 128>}, {pipeline_mode = #tpu.pipeline_mode<synchronous>, transform_indices = @transform_2, window_bounds = array<i64: 1, 128>}, {pipeline_mode = #tpu.pipeline_mode<synchronous>, transform_indices = @transform_3, window_bounds = array<i64: 128, 256>}, {pipeline_mode = #tpu.pipeline_mode<synchronous>, transform_indices = @transform_4, window_bounds = array<i64: 1, 256>}, {pipeline_mode = #tpu.pipeline_mode<synchronous>, transform_indices = @transform_5, window_bounds = array<i64: 256, 512>}, {pipeline_mode = #tpu.pipeline_mode<synchronous>, transform_indices = @transform_6, window_bounds = array<i64: 1, 512>}, {pipeline_mode = #tpu.pipeline_mode<synchronous>, transform_indices = @transform_7, window_bounds = array<i64: 512, 128>}, {pipeline_mode = #tpu.pipeline_mode<synchronous>, transform_indices = @transform_8, window_bounds = array<i64: 1, 128>}, {pipeline_mode = #tpu.pipeline_mode<synchronous>, transform_indices = @transform_9, window_bounds = array<i64: 128, 128>}, {pipeline_mode = #tpu.pipeline_mode<synchronous>, transform_indices = @transform_10, window_bounds = array<i64: 1, 128>}, {transform_indices = @transform_11, window_bounds = array<i64: 8, 128>}]} {
    %c0 = arith.constant 0 : index
    %c0_0 = arith.constant 0 : index
    %0 = vector.load %arg1[%c0, %c0_0] : memref<8x128xbf16, #tpu.memory_space<vmem>>, vector<8x128xbf16>
    %c0_1 = arith.constant 0 : index
    %c0_2 = arith.constant 0 : index
    %1 = vector.load %arg2[%c0_1, %c0_2] : memref<128x128xbf16, #tpu.memory_space<vmem>>, vector<128x128xbf16>
    %cst = arith.constant dense<0.000000e+00> : vector<8x128xf32>
    %2 = tpu.matmul %0, %1, %cst {dimension_numbers = #tpu.dot_dimension_numbers<[1], [0], [0], [1], [0, 0, 1, 1], [], []>} : vector<8x128xbf16>, vector<128x128xbf16>, vector<8x128xf32> -> vector<8x128xf32>
    %c0_3 = arith.constant 0 : index
    %c0_4 = arith.constant 0 : index
    %3 = vector.load %arg3[%c0_3, %c0_4] : memref<1x128xf32, #tpu.memory_space<vmem>>, vector<1x128xf32>
    %4 = vector.broadcast %3 : vector<1x128xf32> to vector<8x128xf32>
    %5 = arith.addf %2, %4 : vector<8x128xf32>
    %cst_5 = arith.constant 0.000000e+00 : f32
    %6 = vector.broadcast %cst_5 : f32 to vector<8x128xf32>
    %7 = arith.maximumf %5, %6 : vector<8x128xf32>
    %8 = arith.truncf %7 : vector<8x128xf32> to vector<8x128xbf16>
    %c0_6 = arith.constant 0 : index
    %c0_7 = arith.constant 0 : index
    %9 = vector.load %arg4[%c0_6, %c0_7] : memref<128x256xbf16, #tpu.memory_space<vmem>>, vector<128x256xbf16>
    %cst_8 = arith.constant dense<0.000000e+00> : vector<8x256xf32>
    %10 = tpu.matmul %8, %9, %cst_8 {dimension_numbers = #tpu.dot_dimension_numbers<[1], [0], [0], [1], [0, 0, 1, 1], [], []>} : vector<8x128xbf16>, vector<128x256xbf16>, vector<8x256xf32> -> vector<8x256xf32>
    %c0_9 = arith.constant 0 : index
    %c0_10 = arith.constant 0 : index
    %11 = vector.load %arg5[%c0_9, %c0_10] : memref<1x256xf32, #tpu.memory_space<vmem>>, vector<1x256xf32>
    %12 = vector.broadcast %11 : vector<1x256xf32> to vector<8x256xf32>
    %13 = arith.addf %10, %12 : vector<8x256xf32>
    %cst_11 = arith.constant 0.000000e+00 : f32
    %14 = vector.broadcast %cst_11 : f32 to vector<8x256xf32>
    %15 = arith.maximumf %13, %14 : vector<8x256xf32>
    %16 = arith.truncf %15 : vector<8x256xf32> to vector<8x256xbf16>
    %c0_12 = arith.constant 0 : index
    %c0_13 = arith.constant 0 : index
    %17 = vector.load %arg6[%c0_12, %c0_13] : memref<256x512xbf16, #tpu.memory_space<vmem>>, vector<256x512xbf16>
    %cst_14 = arith.constant dense<0.000000e+00> : vector<8x512xf32>
    %18 = tpu.matmul %16, %17, %cst_14 {dimension_numbers = #tpu.dot_dimension_numbers<[1], [0], [0], [1], [0, 0, 1, 1], [], []>} : vector<8x256xbf16>, vector<256x512xbf16>, vector<8x512xf32> -> vector<8x512xf32>
    %c0_15 = arith.constant 0 : index
    %c0_16 = arith.constant 0 : index
    %19 = vector.load %arg7[%c0_15, %c0_16] : memref<1x512xf32, #tpu.memory_space<vmem>>, vector<1x512xf32>
    %20 = vector.broadcast %19 : vector<1x512xf32> to vector<8x512xf32>
    %21 = arith.addf %18, %20 : vector<8x512xf32>
    %cst_17 = arith.constant 0.000000e+00 : f32
    %22 = vector.broadcast %cst_17 : f32 to vector<8x512xf32>
    %23 = arith.maximumf %21, %22 : vector<8x512xf32>
    %24 = arith.truncf %23 : vector<8x512xf32> to vector<8x512xbf16>
    %c0_18 = arith.constant 0 : index
    %c0_19 = arith.constant 0 : index
    %25 = vector.load %arg8[%c0_18, %c0_19] : memref<512x128xbf16, #tpu.memory_space<vmem>>, vector<512x128xbf16>
    %cst_20 = arith.constant dense<0.000000e+00> : vector<8x128xf32>
    %26 = tpu.matmul %24, %25, %cst_20 {dimension_numbers = #tpu.dot_dimension_numbers<[1], [0], [0], [1], [0, 0, 1, 1], [], []>} : vector<8x512xbf16>, vector<512x128xbf16>, vector<8x128xf32> -> vector<8x128xf32>
    %c0_21 = arith.constant 0 : index
    %c0_22 = arith.constant 0 : index
    %27 = vector.load %arg9[%c0_21, %c0_22] : memref<1x128xf32, #tpu.memory_space<vmem>>, vector<1x128xf32>
    %28 = vector.broadcast %27 : vector<1x128xf32> to vector<8x128xf32>
    %29 = arith.addf %26, %28 : vector<8x128xf32>
    %cst_23 = arith.constant 0.000000e+00 : f32
    %30 = vector.broadcast %cst_23 : f32 to vector<8x128xf32>
    %31 = arith.maximumf %29, %30 : vector<8x128xf32>
    %32 = arith.truncf %31 : vector<8x128xf32> to vector<8x128xbf16>
    %c0_24 = arith.constant 0 : index
    %c0_25 = arith.constant 0 : index
    %33 = vector.load %arg10[%c0_24, %c0_25] : memref<128x128xbf16, #tpu.memory_space<vmem>>, vector<128x128xbf16>
    %cst_26 = arith.constant dense<0.000000e+00> : vector<8x128xf32>
    %34 = tpu.matmul %32, %33, %cst_26 {dimension_numbers = #tpu.dot_dimension_numbers<[1], [0], [0], [1], [0, 0, 1, 1], [], []>} : vector<8x128xbf16>, vector<128x128xbf16>, vector<8x128xf32> -> vector<8x128xf32>
    %c0_27 = arith.constant 0 : index
    %c0_28 = arith.constant 0 : index
    %35 = vector.load %arg11[%c0_27, %c0_28] : memref<1x128xf32, #tpu.memory_space<vmem>>, vector<1x128xf32>
    %36 = vector.broadcast %35 : vector<1x128xf32> to vector<8x128xf32>
    %37 = arith.addf %34, %36 : vector<8x128xf32>
    %38 = arith.truncf %37 : vector<8x128xf32> to vector<8x128xbf16>
    %c0_29 = arith.constant 0 : index
    %c0_30 = arith.constant 0 : index
    %39 = vector.load %arg12[%c0_29, %c0_30] : memref<8x128xbf16, #tpu.memory_space<vmem>>, vector<8x128xbf16>
    tpu.vector_store %arg12[%c0_29, %c0_30], %38 {strides = array<i32>} : memref<8x128xbf16, #tpu.memory_space<vmem>>, vector<8x128xbf16>,
    return
  }
  func.func @transform_0(%arg0: i32) -> (i32, i32) {
    %c0_i32 = arith.constant 0 : i32
    %c0_i32_0 = arith.constant 0 : i32
    return %arg0, %c0_i32 : i32, i32
  }
  func.func @transform_1(%arg0: i32) -> (i32, i32) {
    %c0_i32 = arith.constant 0 : i32
    %c0_i32_0 = arith.constant 0 : i32
    %c0_i32_1 = arith.constant 0 : i32
    return %c0_i32, %c0_i32_0 : i32, i32
  }
  func.func @transform_2(%arg0: i32) -> (i32, i32) {
    %c0_i32 = arith.constant 0 : i32
    %c0_i32_0 = arith.constant 0 : i32
    %c0_i32_1 = arith.constant 0 : i32
    return %c0_i32, %c0_i32_0 : i32, i32
  }
  func.func @transform_3(%arg0: i32) -> (i32, i32) {
    %c0_i32 = arith.constant 0 : i32
    %c0_i32_0 = arith.constant 0 : i32
    %c0_i32_1 = arith.constant 0 : i32
    return %c0_i32, %c0_i32_0 : i32, i32
  }
  func.func @transform_4(%arg0: i32) -> (i32, i32) {
    %c0_i32 = arith.constant 0 : i32
    %c0_i32_0 = arith.constant 0 : i32
    %c0_i32_1 = arith.constant 0 : i32
    return %c0_i32, %c0_i32_0 : i32, i32
  }
  func.func @transform_5(%arg0: i32) -> (i32, i32) {
    %c0_i32 = arith.constant 0 : i32
    %c0_i32_0 = arith.constant 0 : i32
    %c0_i32_1 = arith.constant 0 : i32
    return %c0_i32, %c0_i32_0 : i32, i32
  }
  func.func @transform_6(%arg0: i32) -> (i32, i32) {
    %c0_i32 = arith.constant 0 : i32
    %c0_i32_0 = arith.constant 0 : i32
    %c0_i32_1 = arith.constant 0 : i32
    return %c0_i32, %c0_i32_0 : i32, i32
  }
  func.func @transform_7(%arg0: i32) -> (i32, i32) {
    %c0_i32 = arith.constant 0 : i32
    %c0_i32_0 = arith.constant 0 : i32
    %c0_i32_1 = arith.constant 0 : i32
    return %c0_i32, %c0_i32_0 : i32, i32
  }
  func.func @transform_8(%arg0: i32) -> (i32, i32) {
    %c0_i32 = arith.constant 0 : i32
    %c0_i32_0 = arith.constant 0 : i32
    %c0_i32_1 = arith.constant 0 : i32
    return %c0_i32, %c0_i32_0 : i32, i32
  }
  func.func @transform_9(%arg0: i32) -> (i32, i32) {
    %c0_i32 = arith.constant 0 : i32
    %c0_i32_0 = arith.constant 0 : i32
    %c0_i32_1 = arith.constant 0 : i32
    return %c0_i32, %c0_i32_0 : i32, i32
  }
  func.func @transform_10(%arg0: i32) -> (i32, i32) {
    %c0_i32 = arith.constant 0 : i32
    %c0_i32_0 = arith.constant 0 : i32
    %c0_i32_1 = arith.constant 0 : i32
    return %c0_i32, %c0_i32_0 : i32, i32
  }
  func.func @transform_11(%arg0: i32) -> (i32, i32) {
    %c0_i32 = arith.constant 0 : i32
    %c0_i32_0 = arith.constant 0 : i32
    return %arg0, %c0_i32 : i32, i32
  }
}

</mosaic_0001>

<llo_original>
// kernel: tpu_custom_call.1
$region0: #{tpu_custom_call.1}
  #allocation0 [shape = 'u32[]', space=smem, size = 0x4, offset = 0x4, fixed_abs, tag = 'smem constant byte address 0x4 - core index']
  #allocation1 [shape = 'u32[144,128]{1,0:T(1,128)}', space=vmem, size = 0x12000, scoped, tag = 'internal scratch']
  %s0 = inlined_call_operand.hbm [shape: bf16[8,128], index: 0, kind: input, shape index: {}]
  %s1 = inlined_call_operand.hbm [shape: bf16[128,128], index: 1, kind: input, shape index: {}]
  %s2 = inlined_call_operand.vmem [shape: f32[1,128], index: 2, kind: input, shape index: {}]
  %s3 = inlined_call_operand.hbm [shape: bf16[128,256], index: 3, kind: input, shape index: {}]
  %s4 = inlined_call_operand.vmem [shape: f32[1,256], index: 4, kind: input, shape index: {}]
  %s5 = inlined_call_operand.hbm [shape: bf16[256,512], index: 5, kind: input, shape index: {}]
  %s6 = inlined_call_operand.vmem [shape: f32[1,512], index: 6, kind: input, shape index: {}]
  %s7 = inlined_call_operand.hbm [shape: bf16[512,128], index: 7, kind: input, shape index: {}]
  %s8 = inlined_call_operand.vmem [shape: f32[1,128], index: 8, kind: input, shape index: {}]
  %s9 = inlined_call_operand.hbm [shape: bf16[128,128], index: 9, kind: input, shape index: {}]
  %s10 = inlined_call_operand.vmem [shape: f32[1,128], index: 10, kind: input, shape index: {}]
  %s11 = inlined_call_operand.hbm [shape: bf16[8,128], index: 11, kind: output, shape index: {}]
  %s12 = sld [smem:[#allocation0]]
  $region78: #{tpu_custom_call.1} parent=0
    _
  %s14 = ssub.s32 1, %s12
  %s15 = scalar_select 0, %s14, %s12
  $region1: #{tpu_custom_call.1} parent=0
    #allocation2 [shape = 'u8[2048]{0}', space=vmem, size = 0x800, scoped, tag = 'input window, operand 0, single buffered']
    #allocation3 [shape = 's32[1]{0}', space=sflag, size = 0x4, scoped, tag = 'scoped memory for tpu_custom_call.1']
    #allocation4 [shape = 's32[1]{0}', space=sflag, size = 0x4, scoped, tag = 'scoped memory for tpu_custom_call.1']
    #allocation5 [shape = 'u8[32768]{0}', space=vmem, size = 0x8000, scoped, tag = 'input window, operand 1, single buffered']
    #allocation6 [shape = 's32[1]{0}', space=sflag, size = 0x4, scoped, tag = 'scoped memory for tpu_custom_call.1']
    #allocation7 [shape = 'u8[65536]{0}', space=vmem, size = 0x10000, scoped, tag = 'input window, operand 3, single buffered']
    #allocation8 [shape = 'u8[262144]{0}', space=vmem, size = 0x40000, scoped, tag = 'input window, operand 5, single buffered']
    #allocation9 [shape = 's32[1]{0}', space=sflag, size = 0x4, scoped, tag = 'scoped memory for tpu_custom_call.1']
    #allocation10 [shape = 'u8[131072]{0}', space=vmem, size = 0x20000, scoped, tag = 'input window, operand 7, single buffered']
    #allocation11 [shape = 'u8[32768]{0}', space=vmem, size = 0x8000, scoped, tag = 'input window, operand 9, single buffered']
    #allocation12 [shape = 's32[1]{0}', space=sflag, size = 0x4, scoped, tag = 'scoped memory for tpu_custom_call.1']
    #allocation13 [shape = 'u8[2048]{0}', space=vmem, size = 0x800, scoped, tag = 'output window, operand 0, single buffered']
    %16 = vsyncpa [#allocation3], 0
    %17 = vsyncpa [#allocation6], 0
    %18 = vsyncpa [#allocation9], 0
    %19 = vsyncpa [#allocation12], 0
    %20 = vsyncpa [#allocation4], 0
    // Predicated region
    $region2: #{tpu_custom_call.1} parent=1 // pred_check
      _
    $region3: #{tpu_custom_call.1} parent=1 // pred_check_branch
      %22 = sbr.rel (0) target = $region5
    $region4: #{tpu_custom_call.1} parent=1 // pred_region
      %s24 = ssub.s32 64, 64
      %25 = vsyncadd [#allocation3], %s24
      %s27 = sshll.u32 [#allocation2], 4
      %s28 = int_to_ptr.vmem [resolvable:$true] %s27
      %30 = dma.hbm_to_vmem [thread:$0]  %s0, 64, %s28, [#allocation3]
    $region5: #{tpu_custom_call.1} parent=1 // pred_fallthru
      _
    // Predicated region
    $region6: #{tpu_custom_call.1} parent=1 // pred_check
      _
    $region7: #{tpu_custom_call.1} parent=1 // pred_check_branch
      %32 = sbr.rel (0) target = $region9
    $region8: #{tpu_custom_call.1} parent=1 // pred_region
      %s34 = ssub.s32 1024, 1024
      %35 = vsyncadd [#allocation6], %s34
      %s36 = sshll.u32 [#allocation5], 4
      %s37 = int_to_ptr.vmem [resolvable:$true] %s36
      %42 = dma.hbm_to_vmem [thread:$0]  %s1, 1024, %s37, [#allocation6], 64, 64, 4
    $region9: #{tpu_custom_call.1} parent=1 // pred_fallthru
      _
    // Predicated region
    $region10: #{tpu_custom_call.1} parent=1 // pred_check
      _
    $region11: #{tpu_custom_call.1} parent=1 // pred_check_branch
      %44 = sbr.rel (0) target = $region13
    $region12: #{tpu_custom_call.1} parent=1 // pred_region
      _
    $region13: #{tpu_custom_call.1} parent=1 // pred_fallthru
      _
    // Predicated region
    $region14: #{tpu_custom_call.1} parent=1 // pred_check
      _
    $region15: #{tpu_custom_call.1} parent=1 // pred_check_branch
      %46 = sbr.rel (0) target = $region17
    $region16: #{tpu_custom_call.1} parent=1 // pred_region
      %s48 = ssub.s32 2048, 2048
      %49 = vsyncadd [#allocation6], %s48
      %s50 = sshll.u32 [#allocation7], 4
      %s51 = int_to_ptr.vmem [resolvable:$true] %s50
      %56 = dma.hbm_to_vmem [thread:$0]  %s3, 2048, %s51, [#allocation6], 128, 128, 8
    $region17: #{tpu_custom_call.1} parent=1 // pred_fallthru
      _
    // Predicated region
    $region18: #{tpu_custom_call.1} parent=1 // pred_check
      _
    $region19: #{tpu_custom_call.1} parent=1 // pred_check_branch
      %58 = sbr.rel (0) target = $region21
    $region20: #{tpu_custom_call.1} parent=1 // pred_region
      _
    $region21: #{tpu_custom_call.1} parent=1 // pred_fallthru
      _
    // Predicated region
    $region22: #{tpu_custom_call.1} parent=1 // pred_check
      _
    $region23: #{tpu_custom_call.1} parent=1 // pred_check_branch
      %60 = sbr.rel (0) target = $region25
    $region24: #{tpu_custom_call.1} parent=1 // pred_region
      %s62 = ssub.s32 8192, 8192
      %63 = vsyncadd [#allocation9], %s62
      %s64 = sshll.u32 [#allocation8], 4
      %s65 = int_to_ptr.vmem [resolvable:$true] %s64
      %70 = dma.hbm_to_vmem [thread:$0]  %s5, 8192, %s65, [#allocation9], 256, 256, 16
    $region25: #{tpu_custom_call.1} parent=1 // pred_fallthru
      _
    // Predicated region
    $region26: #{tpu_custom_call.1} parent=1 // pred_check
      _
    $region27: #{tpu_custom_call.1} parent=1 // pred_check_branch
      %72 = sbr.rel (0) target = $region29
    $region28: #{tpu_custom_call.1} parent=1 // pred_region
      _
    $region29: #{tpu_custom_call.1} parent=1 // pred_fallthru
      _
    // Predicated region
    $region30: #{tpu_custom_call.1} parent=1 // pred_check
      _
    $region31: #{tpu_custom_call.1} parent=1 // pred_check_branch
      %74 = sbr.rel (0) target = $region33
    $region32: #{tpu_custom_call.1} parent=1 // pred_region
      %s76 = ssub.s32 4096, 4096
      %77 = vsyncadd [#allocation9], %s76
      %s78 = sshll.u32 [#allocation10], 4
      %s79 = int_to_ptr.vmem [resolvable:$true] %s78
      %84 = dma.hbm_to_vmem [thread:$0]  %s7, 4096, %s79, [#allocation9], 64, 64, 4
    $region33: #{tpu_custom_call.1} parent=1 // pred_fallthru
      _
    // Predicated region
    $region34: #{tpu_custom_call.1} parent=1 // pred_check
      _
    $region35: #{tpu_custom_call.1} parent=1 // pred_check_branch
      %86 = sbr.rel (0) target = $region37
    $region36: #{tpu_custom_call.1} parent=1 // pred_region
      _
    $region37: #{tpu_custom_call.1} parent=1 // pred_fallthru
      _
    // Predicated region
    $region38: #{tpu_custom_call.1} parent=1 // pred_check
      _
    $region39: #{tpu_custom_call.1} parent=1 // pred_check_branch
      %88 = sbr.rel (0) target = $region41
    $region40: #{tpu_custom_call.1} parent=1 // pred_region
      %s90 = ssub.s32 1024, 1024
      %91 = vsyncadd [#allocation12], %s90
      %s92 = sshll.u32 [#allocation11], 4
      %s93 = int_to_ptr.vmem [resolvable:$true] %s92
      %98 = dma.hbm_to_vmem [thread:$0]  %s9, 1024, %s93, [#allocation12], 64, 64, 4
    $region41: #{tpu_custom_call.1} parent=1 // pred_fallthru
      _
    // Predicated region
    $region42: #{tpu_custom_call.1} parent=1 // pred_check
      _
    $region43: #{tpu_custom_call.1} parent=1 // pred_check_branch
      %100 = sbr.rel (0) target = $region45
    $region44: #{tpu_custom_call.1} parent=1 // pred_region
      _
    $region45: #{tpu_custom_call.1} parent=1 // pred_fallthru
      _
    // Predicated region
    $region46: #{tpu_custom_call.1} parent=1 // pred_check
      _
    $region47: #{tpu_custom_call.1} parent=1 // pred_check_branch
      %102 = sbr.rel (0) target = $region49
    $region48: #{tpu_custom_call.1} parent=1 // pred_region
      %103 = dma.done [#allocation3], 64
    $region49: #{tpu_custom_call.1} parent=1 // pred_fallthru
      _
    // Predicated region
    $region50: #{tpu_custom_call.1} parent=1 // pred_check
      _
    $region51: #{tpu_custom_call.1} parent=1 // pred_check_branch
      %105 = sbr.rel (0) target = $region53
    $region52: #{tpu_custom_call.1} parent=1 // pred_region
      %106 = dma.done [#allocation6], 1024
    $region53: #{tpu_custom_call.1} parent=1 // pred_fallthru
      _
    // Predicated region
    $region54: #{tpu_custom_call.1} parent=1 // pred_check
      _
    $region55: #{tpu_custom_call.1} parent=1 // pred_check_branch
      %108 = sbr.rel (0) target = $region57
    $region56: #{tpu_custom_call.1} parent=1 // pred_region
      %109 = dma.done [#allocation6], 2048
    $region57: #{tpu_custom_call.1} parent=1 // pred_fallthru
      _
    // Predicated region
    $region58: #{tpu_custom_call.1} parent=1 // pred_check
      _
    $region59: #{tpu_custom_call.1} parent=1 // pred_check_branch
      %111 = sbr.rel (0) target = $region61
    $region60: #{tpu_custom_call.1} parent=1 // pred_region
      %112 = dma.done [#allocation9], 8192
    $region61: #{tpu_custom_call.1} parent=1 // pred_fallthru
      _
    // Predicated region
    $region62: #{tpu_custom_call.1} parent=1 // pred_check
      _
    $region63: #{tpu_custom_call.1} parent=1 // pred_check_branch
      %114 = sbr.rel (0) target = $region65
    $region64: #{tpu_custom_call.1} parent=1 // pred_region
      %115 = dma.done [#allocation9], 4096
    $region65: #{tpu_custom_call.1} parent=1 // pred_fallthru
      _
    // Predicated region
    $region66: #{tpu_custom_call.1} parent=1 // pred_check
      _
    $region67: #{tpu_custom_call.1} parent=1 // pred_check_branch
      %117 = sbr.rel (0) target = $region69
    $region68: #{tpu_custom_call.1} parent=1 // pred_region
      %118 = dma.done [#allocation12], 1024
    $region69: #{tpu_custom_call.1} parent=1 // pred_fallthru
      _
    %v120 = vld [vmem:[#allocation2] sm:$0xf]
    %v121 = vld [vmem:[#allocation5] sm:$0xf]
    %v122 = vld [vmem:[#allocation5 + $0x4] sm:$0xf]
    %v123 = vld [vmem:[#allocation5 + $0x8] sm:$0xf]
    %v124 = vld [vmem:[#allocation5 + $0xc] sm:$0xf]
    %v125 = vld [vmem:[#allocation5 + $0x10] sm:$0xf]
    %v126 = vld [vmem:[#allocation5 + $0x14] sm:$0xf]
    %v127 = vld [vmem:[#allocation5 + $0x18] sm:$0xf]
    %v128 = vld [vmem:[#allocation5 + $0x1c] sm:$0xf]
    %v129 = vld [vmem:[#allocation5 + $0x20] sm:$0xf]
    %v130 = vld [vmem:[#allocation5 + $0x24] sm:$0xf]
    %v131 = vld [vmem:[#allocation5 + $0x28] sm:$0xf]
    %v132 = vld [vmem:[#allocation5 + $0x2c] sm:$0xf]
    %v133 = vld [vmem:[#allocation5 + $0x30] sm:$0xf]
    %v134 = vld [vmem:[#allocation5 + $0x34] sm:$0xf]
    %v135 = vld [vmem:[#allocation5 + $0x38] sm:$0xf]
    %v136 = vld [vmem:[#allocation5 + $0x3c] sm:$0xf]
    %v137 = vld [vmem:[%s2] sm:$0x1]
    %v139 = vlaneseq
    %v140 = vshrl.u32 %v139, 7
    %v141 = vsub.s32 0, %v140
    %v142 = vrot.slane %v137, %v141
    %v160 = vunpack.c.l.b16 %v121
    %v161 = vunpack.c.l.b16 %v122
    %v162 = vunpack.c.l.b16 %v123
    %v163 = vunpack.c.l.b16 %v124
    %v164 = vunpack.c.l.b16 %v125
    %v165 = vunpack.c.l.b16 %v126
    %v166 = vunpack.c.l.b16 %v127
    %v167 = vunpack.c.l.b16 %v128
    %v168 = vunpack.c.l.b16 %v129
    %v169 = vunpack.c.l.b16 %v130
    %v170 = vunpack.c.l.b16 %v131
    %v171 = vunpack.c.l.b16 %v132
    %v172 = vunpack.c.l.b16 %v133
    %v173 = vunpack.c.l.b16 %v134
    %v174 = vunpack.c.l.b16 %v135
    %v175 = vunpack.c.l.b16 %v136
    %v176 = vpack.c.b16 %v161, %v160
    %v177 = vpack.c.b16 %v163, %v162
    %v178 = vpack.c.b16 %v165, %v164
    %v179 = vpack.c.b16 %v167, %v166
    %v180 = vpack.c.b16 %v169, %v168
    %v181 = vpack.c.b16 %v171, %v170
    %v182 = vpack.c.b16 %v173, %v172
    %v183 = vpack.c.b16 %v175, %v174
    %192 = vmatprep.subr.bf16.mxu0 0
    %193 = vmatpush1.bf16.msra.mxu0 %v176
    %194 = vmatprep.subr.bf16.mxu0 0
    %195 = vmatpush1.bf16.msra.mxu0 %v177
    %196 = vmatprep.subr.bf16.mxu0 0
    %197 = vmatpush1.bf16.msra.mxu0 %v178
    %198 = vmatprep.subr.bf16.mxu0 0
    %199 = vmatpush1.bf16.msra.mxu0 %v179
    %200 = vmatprep.subr.bf16.mxu0 0
    %201 = vmatpush1.bf16.msra.mxu0 %v180
    %202 = vmatprep.subr.bf16.mxu0 0
    %203 = vmatpush1.bf16.msra.mxu0 %v181
    %204 = vmatprep.subr.bf16.mxu0 0
    %205 = vmatpush1.bf16.msra.mxu0 %v182
    %206 = vmatprep.subr.bf16.mxu0 0
    %207 = vmatpush1.bf16.msra.mxu0 %v183
    %208 = vmatprep.subr.bf16.mxu0 0
    %209 = vmatpush1.bf16.msra.mxu0 0
    %210 = vmatprep.subr.bf16.mxu0 0
    %211 = vmatpush1.bf16.msra.mxu0 0
    %212 = vmatprep.subr.bf16.mxu0 0
    %213 = vmatpush1.bf16.msra.mxu0 0
    %214 = vmatprep.subr.bf16.mxu0 0
    %215 = vmatpush1.bf16.msra.mxu0 0
    %216 = vmatprep.subr.bf16.mxu0 0
    %217 = vmatpush1.bf16.msra.mxu0 0
    %218 = vmatprep.subr.bf16.mxu0 0
    %219 = vmatpush1.bf16.msra.mxu0 0
    %220 = vmatprep.subr.bf16.mxu0 0
    %221 = vmatpush1.bf16.msra.mxu0 0
    %222 = vmatprep.subr.bf16.mxu0 0
    %223 = vmatpush1.bf16.msra.mxu0 0
    %224 = vmatprep.mubr.bf16.mxu0 0
    %225 = vmatmul.mubr.bf16.gmra.mrb[0].mxu0 %v120
    %v226 = vpop.f32.mrb[0].mxu0
    %v227 = vadd.f32 %v142, %v226
    %v228 = vpop.f32.mrb[0].mxu0
    %v229 = vpop.f32.mrb[0].mxu0
    %v230 = vpop.f32.mrb[0].mxu0
    %231 = vdwg.mxu0
    %v232 = vmax.f32 %v227, 0.0
    %v233 = vpack.c.bf16 %v232, %v232
    %v234 = vld [vmem:[#allocation7] sm:$0xff]
    %v235 = vld [vmem:[#allocation7 + $0x8] sm:$0xff]
    %v236 = vld [vmem:[#allocation7 + $0x10] sm:$0xff]
    %v237 = vld [vmem:[#allocation7 + $0x18] sm:$0xff]
    %v238 = vld [vmem:[#allocation7 + $0x20] sm:$0xff]
    %v239 = vld [vmem:[#allocation7 + $0x28] sm:$0xff]
    %v240 = vld [vmem:[#allocation7 + $0x30] sm:$0xff]
    %v241 = vld [vmem:[#allocation7 + $0x38] sm:$0xff]
    %v242 = vld [vmem:[#allocation7 + $0x40] sm:$0xff]
    %v243 = vld [vmem:[#allocation7 + $0x48] sm:$0xff]
    %v244 = vld [vmem:[#allocation7 + $0x50] sm:$0xff]
    %v245 = vld [vmem:[#allocation7 + $0x58] sm:$0xff]
    %v246 = vld [vmem:[#allocation7 + $0x60] sm:$0xff]
    %v247 = vld [vmem:[#allocation7 + $0x68] sm:$0xff]
    %v248 = vld [vmem:[#allocation7 + $0x70] sm:$0xff]
    %v249 = vld [vmem:[#allocation7 + $0x78] sm:$0xff]
    %v250 = vld [vmem:[%s4] sm:$0x3]
    %v252 = vlaneseq
    %v253 = vshrl.u32 %v252, 7
    %v254 = vsub.s32 0, %v253
    %v255 = vrot.slane %v250, %v254
    %v256 = vlaneseq
    %v257 = vshrl.u32 %v256, 7
    %v258 = vsub.s32 1, %v257
    %v259 = vrot.slane %v250, %v258
    %v278 = vunpack.c.l.b16 %v234
    %v279 = vunpack.c.h.b16 %v234
    %v280 = vunpack.c.l.b16 %v235
    %v281 = vunpack.c.h.b16 %v235
    %v282 = vunpack.c.l.b16 %v236
    %v283 = vunpack.c.h.b16 %v236
    %v284 = vunpack.c.l.b16 %v237
    %v285 = vunpack.c.h.b16 %v237
    %v286 = vunpack.c.l.b16 %v238
    %v287 = vunpack.c.h.b16 %v238
    %v288 = vunpack.c.l.b16 %v239
    %v289 = vunpack.c.h.b16 %v239
    %v290 = vunpack.c.l.b16 %v240
    %v291 = vunpack.c.h.b16 %v240
    %v292 = vunpack.c.l.b16 %v241
    %v293 = vunpack.c.h.b16 %v241
    %v294 = vunpack.c.l.b16 %v242
    %v295 = vunpack.c.h.b16 %v242
    %v296 = vunpack.c.l.b16 %v243
    %v297 = vunpack.c.h.b16 %v243
    %v298 = vunpack.c.l.b16 %v244
    %v299 = vunpack.c.h.b16 %v244
    %v300 = vunpack.c.l.b16 %v245
    %v301 = vunpack.c.h.b16 %v245
    %v302 = vunpack.c.l.b16 %v246
    %v303 = vunpack.c.h.b16 %v246
    %v304 = vunpack.c.l.b16 %v247
    %v305 = vunpack.c.h.b16 %v247
    %v306 = vunpack.c.l.b16 %v248
    %v307 = vunpack.c.h.b16 %v248
    %v308 = vunpack.c.l.b16 %v249
    %v309 = vunpack.c.h.b16 %v249
    %v310 = vpack.c.b16 %v280, %v278
    %v311 = vpack.c.b16 %v281, %v279
    %v312 = vpack.c.b16 %v284, %v282
    %v313 = vpack.c.b16 %v285, %v283
    %v314 = vpack.c.b16 %v288, %v286
    %v315 = vpack.c.b16 %v289, %v287
    %v316 = vpack.c.b16 %v292, %v290
    %v317 = vpack.c.b16 %v293, %v291
    %v318 = vpack.c.b16 %v296, %v294
    %v319 = vpack.c.b16 %v297, %v295
    %v320 = vpack.c.b16 %v300, %v298
    %v321 = vpack.c.b16 %v301, %v299
    %v322 = vpack.c.b16 %v304, %v302
    %v323 = vpack.c.b16 %v305, %v303
    %v324 = vpack.c.b16 %v308, %v306
    %v325 = vpack.c.b16 %v309, %v307
    %342 = vmatprep.subr.bf16.mxu0 %v311
    %343 = vmatpush1.bf16.msra.mxu0 %v310
    %344 = vmatprep.subr.bf16.mxu0 %v313
    %345 = vmatpush1.bf16.msra.mxu0 %v312
    %346 = vmatprep.subr.bf16.mxu0 %v315
    %347 = vmatpush1.bf16.msra.mxu0 %v314
    %348 = vmatprep.subr.bf16.mxu0 %v317
    %349 = vmatpush1.bf16.msra.mxu0 %v316
    %350 = vmatprep.subr.bf16.mxu0 %v319
    %351 = vmatpush1.bf16.msra.mxu0 %v318
    %352 = vmatprep.subr.bf16.mxu0 %v321
    %353 = vmatpush1.bf16.msra.mxu0 %v320
    %354 = vmatprep.subr.bf16.mxu0 %v323
    %355 = vmatpush1.bf16.msra.mxu0 %v322
    %356 = vmatprep.subr.bf16.mxu0 %v325
    %357 = vmatpush1.bf16.msra.mxu0 %v324
    %358 = vmatprep.subr.bf16.mxu0 0
    %359 = vmatpush1.bf16.msra.mxu0 0
    %360 = vmatprep.subr.bf16.mxu0 0
    %361 = vmatpush1.bf16.msra.mxu0 0
    %362 = vmatprep.subr.bf16.mxu0 0
    %363 = vmatpush1.bf16.msra.mxu0 0
    %364 = vmatprep.subr.bf16.mxu0 0
    %365 = vmatpush1.bf16.msra.mxu0 0
    %366 = vmatprep.subr.bf16.mxu0 0
    %367 = vmatpush1.bf16.msra.mxu0 0
    %368 = vmatprep.subr.bf16.mxu0 0
    %369 = vmatpush1.bf16.msra.mxu0 0
    %370 = vmatprep.subr.bf16.mxu0 0
    %371 = vmatpush1.bf16.msra.mxu0 0
    %372 = vmatprep.subr.bf16.mxu0 0
    %373 = vmatpush1.bf16.msra.mxu0 0
    %374 = vmatprep.mubr.bf16.mxu0 0
    %375 = vmatmul.mubr.bf16.gmra.mrb[0].mxu0 %v233
    %v376 = vpop.f32.mrb[0].mxu0
    %v377 = vadd.f32 %v255, %v376
    %v378 = vpop.f32.mrb[0].mxu0
    %v379 = vadd.f32 %v259, %v378
    %v380 = vpop.f32.mrb[0].mxu0
    %v381 = vpop.f32.mrb[0].mxu0
    %382 = vdwg.mxu0
    %v383 = vmax.f32 %v377, 0.0
    %v384 = vmax.f32 %v379, 0.0
    %v385 = vpack.c.bf16 %v383, %v383
    %v386 = vpack.c.bf16 %v384, %v384
    %v387 = vld [vmem:[#allocation8] sm:$0xff]
    %v388 = vld [vmem:[#allocation8 + $0x8] sm:$0xff]
    %v389 = vld [vmem:[#allocation8 + $0x10] sm:$0xff]
    %v390 = vld [vmem:[#allocation8 + $0x18] sm:$0xff]
    %v391 = vld [vmem:[#allocation8 + $0x20] sm:$0xff]
    %v392 = vld [vmem:[#allocation8 + $0x28] sm:$0xff]
    %v393 = vld [vmem:[#allocation8 + $0x30] sm:$0xff]
    %v394 = vld [vmem:[#allocation8 + $0x38] sm:$0xff]
    %v395 = vld [vmem:[#allocation8 + $0x40] sm:$0xff]
    %v396 = vld [vmem:[#allocation8 + $0x48] sm:$0xff]
    %v397 = vld [vmem:[#allocation8 + $0x50] sm:$0xff]
    %v398 = vld [vmem:[#allocation8 + $0x58] sm:$0xff]
    %v399 = vld [vmem:[#allocation8 + $0x60] sm:$0xff]
    %v400 = vld [vmem:[#allocation8 + $0x68] sm:$0xff]
    %v401 = vld [vmem:[#allocation8 + $0x70] sm:$0xff]
    %v402 = vld [vmem:[#allocation8 + $0x78] sm:$0xff]
    %v403 = vld [vmem:[#allocation8 + $0x80] sm:$0xff]
    %v404 = vld [vmem:[#allocation8 + $0x88] sm:$0xff]
    %v405 = vld [vmem:[#allocation8 + $0x90] sm:$0xff]
    %v406 = vld [vmem:[#allocation8 + $0x98] sm:$0xff]
    %v407 = vld [vmem:[#allocation8 + $0xa0] sm:$0xff]
    %v408 = vld [vmem:[#allocation8 + $0xa8] sm:$0xff]
    %v409 = vld [vmem:[#allocation8 + $0xb0] sm:$0xff]
    %v410 = vld [vmem:[#allocation8 + $0xb8] sm:$0xff]
    %v411 = vld [vmem:[#allocation8 + $0xc0] sm:$0xff]
    %v412 = vld [vmem:[#allocation8 + $0xc8] sm:$0xff]
    %v413 = vld [vmem:[#allocation8 + $0xd0] sm:$0xff]
    %v414 = vld [vmem:[#allocation8 + $0xd8] sm:$0xff]
    %v415 = vld [vmem:[#allocation8 + $0xe0] sm:$0xff]
    %v416 = vld [vmem:[#allocation8 + $0xe8] sm:$0xff]
    %v417 = vld [vmem:[#allocation8 + $0xf0] sm:$0xff]
    %v418 = vld [vmem:[#allocation8 + $0xf8] sm:$0xff]
    %v419 = vld [vmem:[#allocation8 + $0x100] sm:$0xff]
    %v420 = vld [vmem:[#allocation8 + $0x108] sm:$0xff]
    %v421 = vld [vmem:[#allocation8 + $0x110] sm:$0xff]
    %v422 = vld [vmem:[#allocation8 + $0x118] sm:$0xff]
    %v423 = vld [vmem:[#allocation8 + $0x120] sm:$0xff]
    %v424 = vld [vmem:[#allocation8 + $0x128] sm:$0xff]
    %v425 = vld [vmem:[#allocation8 + $0x130] sm:$0xff]
    %v426 = vld [vmem:[#allocation8 + $0x138] sm:$0xff]
    %v427 = vld [vmem:[#allocation8 + $0x140] sm:$0xff]
    %v428 = vld [vmem:[#allocation8 + $0x148] sm:$0xff]
    %v429 = vld [vmem:[#allocation8 + $0x150] sm:$0xff]
    %v430 = vld [vmem:[#allocation8 + $0x158] sm:$0xff]
    %v431 = vld [vmem:[#allocation8 + $0x160] sm:$0xff]
    %v432 = vld [vmem:[#allocation8 + $0x168] sm:$0xff]
    %v433 = vld [vmem:[#allocation8 + $0x170] sm:$0xff]
    %v434 = vld [vmem:[#allocation8 + $0x178] sm:$0xff]
    %v435 = vld [vmem:[#allocation8 + $0x180] sm:$0xff]
    %v436 = vld [vmem:[#allocation8 + $0x188] sm:$0xff]
    %v437 = vld [vmem:[#allocation8 + $0x190] sm:$0xff]
    %v438 = vld [vmem:[#allocation8 + $0x198] sm:$0xff]
    %v439 = vld [vmem:[#allocation8 + $0x1a0] sm:$0xff]
    %v440 = vld [vmem:[#allocation8 + $0x1a8] sm:$0xff]
    %v441 = vld [vmem:[#allocation8 + $0x1b0] sm:$0xff]
    %v442 = vld [vmem:[#allocation8 + $0x1b8] sm:$0xff]
    %v443 = vld [vmem:[#allocation8 + $0x1c0] sm:$0xff]
    %v444 = vld [vmem:[#allocation8 + $0x1c8] sm:$0xff]
    %v445 = vld [vmem:[#allocation8 + $0x1d0] sm:$0xff]
    %v446 = vld [vmem:[#allocation8 + $0x1d8] sm:$0xff]
    %v447 = vld [vmem:[#allocation8 + $0x1e0] sm:$0xff]
    %v448 = vld [vmem:[#allocation8 + $0x1e8] sm:$0xff]
    %v449 = vld [vmem:[#allocation8 + $0x1f0] sm:$0xff]
    %v450 = vld [vmem:[#allocation8 + $0x1f8] sm:$0xff]
    %v451 = vld [vmem:[%s6] sm:$0xf]
    %v453 = vlaneseq
    %v454 = vshrl.u32 %v453, 7
    %v455 = vsub.s32 0, %v454
    %v456 = vrot.slane %v451, %v455
    %v457 = vlaneseq
    %v458 = vshrl.u32 %v457, 7
    %v459 = vsub.s32 1, %v458
    %v460 = vrot.slane %v451, %v459
    %v461 = vlaneseq
    %v462 = vshrl.u32 %v461, 7
    %v463 = vsub.s32 2, %v462
    %v464 = vrot.slane %v451, %v463
    %v465 = vlaneseq
    %v466 = vshrl.u32 %v465, 7
    %v467 = vsub.s32 3, %v466
    %v468 = vrot.slane %v451, %v467
    %v537 = vunpack.c.l.b16 %v387
    %v538 = vunpack.c.h.b16 %v387
    %v539 = vunpack.c.l.b16 %v388
    %v540 = vunpack.c.h.b16 %v388
    %v541 = vunpack.c.l.b16 %v389
    %v542 = vunpack.c.h.b16 %v389
    %v543 = vunpack.c.l.b16 %v390
    %v544 = vunpack.c.h.b16 %v390
    %v545 = vunpack.c.l.b16 %v391
    %v546 = vunpack.c.h.b16 %v391
    %v547 = vunpack.c.l.b16 %v392
    %v548 = vunpack.c.h.b16 %v392
    %v549 = vunpack.c.l.b16 %v393
    %v550 = vunpack.c.h.b16 %v393
    %v551 = vunpack.c.l.b16 %v394
    %v552 = vunpack.c.h.b16 %v394
    %v553 = vunpack.c.l.b16 %v395
    %v554 = vunpack.c.h.b16 %v395
    %v555 = vunpack.c.l.b16 %v396
    %v556 = vunpack.c.h.b16 %v396
    %v557 = vunpack.c.l.b16 %v397
    %v558 = vunpack.c.h.b16 %v397
    %v559 = vunpack.c.l.b16 %v398
    %v560 = vunpack.c.h.b16 %v398
    %v561 = vunpack.c.l.b16 %v399
    %v562 = vunpack.c.h.b16 %v399
    %v563 = vunpack.c.l.b16 %v400
    %v564 = vunpack.c.h.b16 %v400
    %v565 = vunpack.c.l.b16 %v401
    %v566 = vunpack.c.h.b16 %v401
    %v567 = vunpack.c.l.b16 %v402
    %v568 = vunpack.c.h.b16 %v402
    %v569 = vunpack.c.l.b16 %v403
    %v570 = vunpack.c.h.b16 %v403
    %v571 = vunpack.c.l.b16 %v404
    %v572 = vunpack.c.h.b16 %v404
    %v573 = vunpack.c.l.b16 %v405
    %v574 = vunpack.c.h.b16 %v405
    %v575 = vunpack.c.l.b16 %v406
    %v576 = vunpack.c.h.b16 %v406
    %v577 = vunpack.c.l.b16 %v407
    %v578 = vunpack.c.h.b16 %v407
    %v579 = vunpack.c.l.b16 %v408
    %v580 = vunpack.c.h.b16 %v408
    %v581 = vunpack.c.l.b16 %v409
    %v582 = vunpack.c.h.b16 %v409
    %v583 = vunpack.c.l.b16 %v410
    %v584 = vunpack.c.h.b16 %v410
    %v585 = vunpack.c.l.b16 %v411
    %v586 = vunpack.c.h.b16 %v411
    %v587 = vunpack.c.l.b16 %v412
    %v588 = vunpack.c.h.b16 %v412
    %v589 = vunpack.c.l.b16 %v413
    %v590 = vunpack.c.h.b16 %v413
    %v591 = vunpack.c.l.b16 %v414
    %v592 = vunpack.c.h.b16 %v414
    %v593 = vunpack.c.l.b16 %v415
    %v594 = vunpack.c.h.b16 %v415
    %v595 = vunpack.c.l.b16 %v416
    %v596 = vunpack.c.h.b16 %v416
    %v597 = vunpack.c.l.b16 %v417
    %v598 = vunpack.c.h.b16 %v417
    %v599 = vunpack.c.l.b16 %v418
    %v600 = vunpack.c.h.b16 %v418
    %v601 = vunpack.c.l.b16 %v419
    %v602 = vunpack.c.h.b16 %v419
    %v603 = vunpack.c.l.b16 %v420
    %v604 = vunpack.c.h.b16 %v420
    %v605 = vunpack.c.l.b16 %v421
    %v606 = vunpack.c.h.b16 %v421
    %v607 = vunpack.c.l.b16 %v422
    %v608 = vunpack.c.h.b16 %v422
    %v609 = vunpack.c.l.b16 %v423
    %v610 = vunpack.c.h.b16 %v423
    %v611 = vunpack.c.l.b16 %v424
    %v612 = vunpack.c.h.b16 %v424
    %v613 = vunpack.c.l.b16 %v425
    %v614 = vunpack.c.h.b16 %v425
    %v615 = vunpack.c.l.b16 %v426
    %v616 = vunpack.c.h.b16 %v426
    %v617 = vunpack.c.l.b16 %v427
    %v618 = vunpack.c.h.b16 %v427
    %v619 = vunpack.c.l.b16 %v428
    %v620 = vunpack.c.h.b16 %v428
    %v621 = vunpack.c.l.b16 %v429
    %v622 = vunpack.c.h.b16 %v429
    %v623 = vunpack.c.l.b16 %v430
    %v624 = vunpack.c.h.b16 %v430
    %v625 = vunpack.c.l.b16 %v431
    %v626 = vunpack.c.h.b16 %v431
    %v627 = vunpack.c.l.b16 %v432
    %v628 = vunpack.c.h.b16 %v432
    %v629 = vunpack.c.l.b16 %v433
    %v630 = vunpack.c.h.b16 %v433
    %v631 = vunpack.c.l.b16 %v434
    %v632 = vunpack.c.h.b16 %v434
    %v633 = vunpack.c.l.b16 %v435
    %v634 = vunpack.c.h.b16 %v435
    %v635 = vunpack.c.l.b16 %v436
    %v636 = vunpack.c.h.b16 %v436
    %v637 = vunpack.c.l.b16 %v437
    %v638 = vunpack.c.h.b16 %v437
    %v639 = vunpack.c.l.b16 %v438
    %v640 = vunpack.c.h.b16 %v438
    %v641 = vunpack.c.l.b16 %v439
    %v642 = vunpack.c.h.b16 %v439
    %v643 = vunpack.c.l.b16 %v440
    %v644 = vunpack.c.h.b16 %v440
    %v645 = vunpack.c.l.b16 %v441
    %v646 = vunpack.c.h.b16 %v441
    %v647 = vunpack.c.l.b16 %v442
    %v648 = vunpack.c.h.b16 %v442
    %v649 = vunpack.c.l.b16 %v443
    %v650 = vunpack.c.h.b16 %v443
    %v651 = vunpack.c.l.b16 %v444
    %v652 = vunpack.c.h.b16 %v444
    %v653 = vunpack.c.l.b16 %v445
    %v654 = vunpack.c.h.b16 %v445
    %v655 = vunpack.c.l.b16 %v446
    %v656 = vunpack.c.h.b16 %v446
    %v657 = vunpack.c.l.b16 %v447
    %v658 = vunpack.c.h.b16 %v447
    %v659 = vunpack.c.l.b16 %v448
    %v660 = vunpack.c.h.b16 %v448
    %v661 = vunpack.c.l.b16 %v449
    %v662 = vunpack.c.h.b16 %v449
    %v663 = vunpack.c.l.b16 %v450
    %v664 = vunpack.c.h.b16 %v450
    %v665 = vpack.c.b16 %v541, %v537
    %v666 = vpack.c.b16 %v542, %v538
    %v667 = vpack.c.b16 %v543, %v539
    %v668 = vpack.c.b16 %v544, %v540
    %v669 = vpack.c.b16 %v549, %v545
    %v670 = vpack.c.b16 %v550, %v546
    %v671 = vpack.c.b16 %v551, %v547
    %v672 = vpack.c.b16 %v552, %v548
    %v673 = vpack.c.b16 %v557, %v553
    %v674 = vpack.c.b16 %v558, %v554
    %v675 = vpack.c.b16 %v559, %v555
    %v676 = vpack.c.b16 %v560, %v556
    %v677 = vpack.c.b16 %v565, %v561
    %v678 = vpack.c.b16 %v566, %v562
    %v679 = vpack.c.b16 %v567, %v563
    %v680 = vpack.c.b16 %v568, %v564
    %v681 = vpack.c.b16 %v573, %v569
    %v682 = vpack.c.b16 %v574, %v570
    %v683 = vpack.c.b16 %v575, %v571
    %v684 = vpack.c.b16 %v576, %v572
    %v685 = vpack.c.b16 %v581, %v577
    %v686 = vpack.c.b16 %v582, %v578
    %v687 = vpack.c.b16 %v583, %v579
    %v688 = vpack.c.b16 %v584, %v580
    %v689 = vpack.c.b16 %v589, %v585
    %v690 = vpack.c.b16 %v590, %v586
    %v691 = vpack.c.b16 %v591, %v587
    %v692 = vpack.c.b16 %v592, %v588
    %v693 = vpack.c.b16 %v597, %v593
    %v694 = vpack.c.b16 %v598, %v594
    %v695 = vpack.c.b16 %v599, %v595
    %v696 = vpack.c.b16 %v600, %v596
    %v697 = vpack.c.b16 %v605, %v601
    %v698 = vpack.c.b16 %v606, %v602
    %v699 = vpack.c.b16 %v607, %v603
    %v700 = vpack.c.b16 %v608, %v604
    %v701 = vpack.c.b16 %v613, %v609
    %v702 = vpack.c.b16 %v614, %v610
    %v703 = vpack.c.b16 %v615, %v611
    %v704 = vpack.c.b16 %v616, %v612
    %v705 = vpack.c.b16 %v621, %v617
    %v706 = vpack.c.b16 %v622, %v618
    %v707 = vpack.c.b16 %v623, %v619
    %v708 = vpack.c.b16 %v624, %v620
    %v709 = vpack.c.b16 %v629, %v625
    %v710 = vpack.c.b16 %v630, %v626
    %v711 = vpack.c.b16 %v631, %v627
    %v712 = vpack.c.b16 %v632, %v628
    %v713 = vpack.c.b16 %v637, %v633
    %v714 = vpack.c.b16 %v638, %v634
    %v715 = vpack.c.b16 %v639, %v635
    %v716 = vpack.c.b16 %v640, %v636
    %v717 = vpack.c.b16 %v645, %v641
    %v718 = vpack.c.b16 %v646, %v642
    %v719 = vpack.c.b16 %v647, %v643
    %v720 = vpack.c.b16 %v648, %v644
    %v721 = vpack.c.b16 %v653, %v649
    %v722 = vpack.c.b16 %v654, %v650
    %v723 = vpack.c.b16 %v655, %v651
    %v724 = vpack.c.b16 %v656, %v652
    %v725 = vpack.c.b16 %v661, %v657
    %v726 = vpack.c.b16 %v662, %v658
    %v727 = vpack.c.b16 %v663, %v659
    %v728 = vpack.c.b16 %v664, %v660
    %793 = vmatprep.subr.bf16.mxu0 %v666
    %794 = vmatpush1.bf16.msra.mxu0 %v665
    %795 = vmatprep.subr.bf16.mxu0 %v670
    %796 = vmatpush1.bf16.msra.mxu0 %v669
    %797 = vmatprep.subr.bf16.mxu0 %v674
    %798 = vmatpush1.bf16.msra.mxu0 %v673
    %799 = vmatprep.subr.bf16.mxu0 %v678
    %800 = vmatpush1.bf16.msra.mxu0 %v677
    %801 = vmatprep.subr.bf16.mxu0 %v682
    %802 = vmatpush1.bf16.msra.mxu0 %v681
    %803 = vmatprep.subr.bf16.mxu0 %v686
    %804 = vmatpush1.bf16.msra.mxu0 %v685
    %805 = vmatprep.subr.bf16.mxu0 %v690
    %806 = vmatpush1.bf16.msra.mxu0 %v689
    %807 = vmatprep.subr.bf16.mxu0 %v694
    %808 = vmatpush1.bf16.msra.mxu0 %v693
    %809 = vmatprep.subr.bf16.mxu0 %v698
    %810 = vmatpush1.bf16.msra.mxu0 %v697
    %811 = vmatprep.subr.bf16.mxu0 %v702
    %812 = vmatpush1.bf16.msra.mxu0 %v701
    %813 = vmatprep.subr.bf16.mxu0 %v706
    %814 = vmatpush1.bf16.msra.mxu0 %v705
    %815 = vmatprep.subr.bf16.mxu0 %v710
    %816 = vmatpush1.bf16.msra.mxu0 %v709
    %817 = vmatprep.subr.bf16.mxu0 %v714
    %818 = vmatpush1.bf16.msra.mxu0 %v713
    %819 = vmatprep.subr.bf16.mxu0 %v718
    %820 = vmatpush1.bf16.msra.mxu0 %v717
    %821 = vmatprep.subr.bf16.mxu0 %v722
    %822 = vmatpush1.bf16.msra.mxu0 %v721
    %823 = vmatprep.subr.bf16.mxu0 %v726
    %824 = vmatpush1.bf16.msra.mxu0 %v725
    %825 = vmatprep.mubr.bf16.mxu0 %v386
    %826 = vmatmul.mubr.bf16.gmra.mrb[0].mxu0 %v385
    %v827 = vpop.f32.mrb[0].mxu0
    %v828 = vadd.f32 %v456, %v827
    %v829 = vpop.f32.mrb[0].mxu0
    %v830 = vadd.f32 %v460, %v829
    %v831 = vpop.f32.mrb[0].mxu0
    %v832 = vpop.f32.mrb[0].mxu0
    %833 = vdwg.mxu0
    %834 = vmatprep.subr.bf16.mxu0 %v668
    %835 = vmatpush1.bf16.msra.mxu0 %v667
    %836 = vmatprep.subr.bf16.mxu0 %v672
    %837 = vmatpush1.bf16.msra.mxu0 %v671
    %838 = vmatprep.subr.bf16.mxu0 %v676
    %839 = vmatpush1.bf16.msra.mxu0 %v675
    %840 = vmatprep.subr.bf16.mxu0 %v680
    %841 = vmatpush1.bf16.msra.mxu0 %v679
    %842 = vmatprep.subr.bf16.mxu0 %v684
    %843 = vmatpush1.bf16.msra.mxu0 %v683
    %844 = vmatprep.subr.bf16.mxu0 %v688
    %845 = vmatpush1.bf16.msra.mxu0 %v687
    %846 = vmatprep.subr.bf16.mxu0 %v692
    %847 = vmatpush1.bf16.msra.mxu0 %v691
    %848 = vmatprep.subr.bf16.mxu0 %v696
    %849 = vmatpush1.bf16.msra.mxu0 %v695
    %850 = vmatprep.subr.bf16.mxu0 %v700
    %851 = vmatpush1.bf16.msra.mxu0 %v699
    %852 = vmatprep.subr.bf16.mxu0 %v704
    %853 = vmatpush1.bf16.msra.mxu0 %v703
    %854 = vmatprep.subr.bf16.mxu0 %v708
    %855 = vmatpush1.bf16.msra.mxu0 %v707
    %856 = vmatprep.subr.bf16.mxu0 %v712
    %857 = vmatpush1.bf16.msra.mxu0 %v711
    %858 = vmatprep.subr.bf16.mxu0 %v716
    %859 = vmatpush1.bf16.msra.mxu0 %v715
    %860 = vmatprep.subr.bf16.mxu0 %v720
    %861 = vmatpush1.bf16.msra.mxu0 %v719
    %862 = vmatprep.subr.bf16.mxu0 %v724
    %863 = vmatpush1.bf16.msra.mxu0 %v723
    %864 = vmatprep.subr.bf16.mxu0 %v728
    %865 = vmatpush1.bf16.msra.mxu0 %v727
    %866 = vmatprep.mubr.bf16.mxu0 %v386
    %867 = vmatmul.mubr.bf16.gmra.mrb[0].mxu0 %v385
    %v868 = vpop.f32.mrb[0].mxu0
    %v869 = vadd.f32 %v464, %v868
    %v870 = vpop.f32.mrb[0].mxu0
    %v871 = vadd.f32 %v468, %v870
    %v872 = vpop.f32.mrb[0].mxu0
    %v873 = vpop.f32.mrb[0].mxu0
    %874 = vdwg.mxu0
    %v875 = vmax.f32 %v828, 0.0
    %v876 = vmax.f32 %v830, 0.0
    %v877 = vmax.f32 %v869, 0.0
    %v878 = vmax.f32 %v871, 0.0
    %v879 = vpack.c.bf16 %v875, %v875
    %v880 = vpack.c.bf16 %v876, %v876
    %v881 = vpack.c.bf16 %v877, %v877
    %v882 = vpack.c.bf16 %v878, %v878
    %v883 = vld [vmem:[#allocation10] sm:$0xf]
    %v884 = vld [vmem:[#allocation10 + $0x4] sm:$0xf]
    %v885 = vld [vmem:[#allocation10 + $0x8] sm:$0xf]
    %v886 = vld [vmem:[#allocation10 + $0xc] sm:$0xf]
    %v887 = vld [vmem:[#allocation10 + $0x10] sm:$0xf]
    %v888 = vld [vmem:[#allocation10 + $0x14] sm:$0xf]
    %v889 = vld [vmem:[#allocation10 + $0x18] sm:$0xf]
    %v890 = vld [vmem:[#allocation10 + $0x1c] sm:$0xf]
    %v891 = vld [vmem:[#allocation10 + $0x20] sm:$0xf]
    %v892 = vld [vmem:[#allocation10 + $0x24] sm:$0xf]
    %v893 = vld [vmem:[#allocation10 + $0x28] sm:$0xf]
    %v894 = vld [vmem:[#allocation10 + $0x2c] sm:$0xf]
    %v895 = vld [vmem:[#allocation10 + $0x30] sm:$0xf]
    %v896 = vld [vmem:[#allocation10 + $0x34] sm:$0xf]
    %v897 = vld [vmem:[#allocation10 + $0x38] sm:$0xf]
    %v898 = vld [vmem:[#allocation10 + $0x3c] sm:$0xf]
    %v899 = vld [vmem:[#allocation10 + $0x40] sm:$0xf]
    %v900 = vld [vmem:[#allocation10 + $0x44] sm:$0xf]
    %v901 = vld [vmem:[#allocation10 + $0x48] sm:$0xf]
    %v902 = vld [vmem:[#allocation10 + $0x4c] sm:$0xf]
    %v903 = vld [vmem:[#allocation10 + $0x50] sm:$0xf]
    %v904 = vld [vmem:[#allocation10 + $0x54] sm:$0xf]
    %v905 = vld [vmem:[#allocation10 + $0x58] sm:$0xf]
    %v906 = vld [vmem:[#allocation10 + $0x5c] sm:$0xf]
    %v907 = vld [vmem:[#allocation10 + $0x60] sm:$0xf]
    %v908 = vld [vmem:[#allocation10 + $0x64] sm:$0xf]
    %v909 = vld [vmem:[#allocation10 + $0x68] sm:$0xf]
    %v910 = vld [vmem:[#allocation10 + $0x6c] sm:$0xf]
    %v911 = vld [vmem:[#allocation10 + $0x70] sm:$0xf]
    %v912 = vld [vmem:[#allocation10 + $0x74] sm:$0xf]
    %v913 = vld [vmem:[#allocation10 + $0x78] sm:$0xf]
    %v914 = vld [vmem:[#allocation10 + $0x7c] sm:$0xf]
    %v915 = vld [vmem:[#allocation10 + $0x80] sm:$0xf]
    %v916 = vld [vmem:[#allocation10 + $0x84] sm:$0xf]
    %v917 = vld [vmem:[#allocation10 + $0x88] sm:$0xf]
    %v918 = vld [vmem:[#allocation10 + $0x8c] sm:$0xf]
    %v919 = vld [vmem:[#allocation10 + $0x90] sm:$0xf]
    %v920 = vld [vmem:[#allocation10 + $0x94] sm:$0xf]
    %v921 = vld [vmem:[#allocation10 + $0x98] sm:$0xf]
    %v922 = vld [vmem:[#allocation10 + $0x9c] sm:$0xf]
    %v923 = vld [vmem:[#allocation10 + $0xa0] sm:$0xf]
    %v924 = vld [vmem:[#allocation10 + $0xa4] sm:$0xf]
    %v925 = vld [vmem:[#allocation10 + $0xa8] sm:$0xf]
    %v926 = vld [vmem:[#allocation10 + $0xac] sm:$0xf]
    %v927 = vld [vmem:[#allocation10 + $0xb0] sm:$0xf]
    %v928 = vld [vmem:[#allocation10 + $0xb4] sm:$0xf]
    %v929 = vld [vmem:[#allocation10 + $0xb8] sm:$0xf]
    %v930 = vld [vmem:[#allocation10 + $0xbc] sm:$0xf]
    %v931 = vld [vmem:[#allocation10 + $0xc0] sm:$0xf]
    %v932 = vld [vmem:[#allocation10 + $0xc4] sm:$0xf]
    %v933 = vld [vmem:[#allocation10 + $0xc8] sm:$0xf]
    %v934 = vld [vmem:[#allocation10 + $0xcc] sm:$0xf]
    %v935 = vld [vmem:[#allocation10 + $0xd0] sm:$0xf]
    %v936 = vld [vmem:[#allocation10 + $0xd4] sm:$0xf]
    %v937 = vld [vmem:[#allocation10 + $0xd8] sm:$0xf]
    %v938 = vld [vmem:[#allocation10 + $0xdc] sm:$0xf]
    %v939 = vld [vmem:[#allocation10 + $0xe0] sm:$0xf]
    %v940 = vld [vmem:[#allocation10 + $0xe4] sm:$0xf]
    %v941 = vld [vmem:[#allocation10 + $0xe8] sm:$0xf]
    %v942 = vld [vmem:[#allocation10 + $0xec] sm:$0xf]
    %v943 = vld [vmem:[#allocation10 + $0xf0] sm:$0xf]
    %v944 = vld [vmem:[#allocation10 + $0xf4] sm:$0xf]
    %v945 = vld [vmem:[#allocation10 + $0xf8] sm:$0xf]
    %v946 = vld [vmem:[#allocation10 + $0xfc] sm:$0xf]
    %v947 = vld [vmem:[%s8] sm:$0x1]
    %v949 = vlaneseq
    %v950 = vshrl.u32 %v949, 7
    %v951 = vsub.s32 0, %v950
    %v952 = vrot.slane %v947, %v951
    %v1018 = vunpack.c.l.b16 %v883
    %v1019 = vunpack.c.l.b16 %v884
    %v1020 = vunpack.c.l.b16 %v885
    %v1021 = vunpack.c.l.b16 %v886
    %v1022 = vunpack.c.l.b16 %v887
    %v1023 = vunpack.c.l.b16 %v888
    %v1024 = vunpack.c.l.b16 %v889
    %v1025 = vunpack.c.l.b16 %v890
    %v1026 = vunpack.c.l.b16 %v891
    %v1027 = vunpack.c.l.b16 %v892
    %v1028 = vunpack.c.l.b16 %v893
    %v1029 = vunpack.c.l.b16 %v894
    %v1030 = vunpack.c.l.b16 %v895
    %v1031 = vunpack.c.l.b16 %v896
    %v1032 = vunpack.c.l.b16 %v897
    %v1033 = vunpack.c.l.b16 %v898
    %v1034 = vunpack.c.l.b16 %v899
    %v1035 = vunpack.c.l.b16 %v900
    %v1036 = vunpack.c.l.b16 %v901
    %v1037 = vunpack.c.l.b16 %v902
    %v1038 = vunpack.c.l.b16 %v903
    %v1039 = vunpack.c.l.b16 %v904
    %v1040 = vunpack.c.l.b16 %v905
    %v1041 = vunpack.c.l.b16 %v906
    %v1042 = vunpack.c.l.b16 %v907
    %v1043 = vunpack.c.l.b16 %v908
    %v1044 = vunpack.c.l.b16 %v909
    %v1045 = vunpack.c.l.b16 %v910
    %v1046 = vunpack.c.l.b16 %v911
    %v1047 = vunpack.c.l.b16 %v912
    %v1048 = vunpack.c.l.b16 %v913
    %v1049 = vunpack.c.l.b16 %v914
    %v1050 = vunpack.c.l.b16 %v915
    %v1051 = vunpack.c.l.b16 %v916
    %v1052 = vunpack.c.l.b16 %v917
    %v1053 = vunpack.c.l.b16 %v918
    %v1054 = vunpack.c.l.b16 %v919
    %v1055 = vunpack.c.l.b16 %v920
    %v1056 = vunpack.c.l.b16 %v921
    %v1057 = vunpack.c.l.b16 %v922
    %v1058 = vunpack.c.l.b16 %v923
    %v1059 = vunpack.c.l.b16 %v924
    %v1060 = vunpack.c.l.b16 %v925
    %v1061 = vunpack.c.l.b16 %v926
    %v1062 = vunpack.c.l.b16 %v927
    %v1063 = vunpack.c.l.b16 %v928
    %v1064 = vunpack.c.l.b16 %v929
    %v1065 = vunpack.c.l.b16 %v930
    %v1066 = vunpack.c.l.b16 %v931
    %v1067 = vunpack.c.l.b16 %v932
    %v1068 = vunpack.c.l.b16 %v933
    %v1069 = vunpack.c.l.b16 %v934
    %v1070 = vunpack.c.l.b16 %v935
    %v1071 = vunpack.c.l.b16 %v936
    %v1072 = vunpack.c.l.b16 %v937
    %v1073 = vunpack.c.l.b16 %v938
    %v1074 = vunpack.c.l.b16 %v939
    %v1075 = vunpack.c.l.b16 %v940
    %v1076 = vunpack.c.l.b16 %v941
    %v1077 = vunpack.c.l.b16 %v942
    %v1078 = vunpack.c.l.b16 %v943
    %v1079 = vunpack.c.l.b16 %v944
    %v1080 = vunpack.c.l.b16 %v945
    %v1081 = vunpack.c.l.b16 %v946
    %v1082 = vpack.c.b16 %v1019, %v1018
    %v1083 = vpack.c.b16 %v1021, %v1020
    %v1084 = vpack.c.b16 %v1023, %v1022
    %v1085 = vpack.c.b16 %v1025, %v1024
    %v1086 = vpack.c.b16 %v1027, %v1026
    %v1087 = vpack.c.b16 %v1029, %v1028
    %v1088 = vpack.c.b16 %v1031, %v1030
    %v1089 = vpack.c.b16 %v1033, %v1032
    %v1090 = vpack.c.b16 %v1035, %v1034
    %v1091 = vpack.c.b16 %v1037, %v1036
    %v1092 = vpack.c.b16 %v1039, %v1038
    %v1093 = vpack.c.b16 %v1041, %v1040
    %v1094 = vpack.c.b16 %v1043, %v1042
    %v1095 = vpack.c.b16 %v1045, %v1044
    %v1096 = vpack.c.b16 %v1047, %v1046
    %v1097 = vpack.c.b16 %v1049, %v1048
    %v1098 = vpack.c.b16 %v1051, %v1050
    %v1099 = vpack.c.b16 %v1053, %v1052
    %v1100 = vpack.c.b16 %v1055, %v1054
    %v1101 = vpack.c.b16 %v1057, %v1056
    %v1102 = vpack.c.b16 %v1059, %v1058
    %v1103 = vpack.c.b16 %v1061, %v1060
    %v1104 = vpack.c.b16 %v1063, %v1062
    %v1105 = vpack.c.b16 %v1065, %v1064
    %v1106 = vpack.c.b16 %v1067, %v1066
    %v1107 = vpack.c.b16 %v1069, %v1068
    %v1108 = vpack.c.b16 %v1071, %v1070
    %v1109 = vpack.c.b16 %v1073, %v1072
    %v1110 = vpack.c.b16 %v1075, %v1074
    %v1111 = vpack.c.b16 %v1077, %v1076
    %v1112 = vpack.c.b16 %v1079, %v1078
    %v1113 = vpack.c.b16 %v1081, %v1080
    %1146 = vmatprep.subr.bf16.mxu0 0
    %1147 = vmatpush1.bf16.msra.mxu0 %v1082
    %1148 = vmatprep.subr.bf16.mxu0 0
    %1149 = vmatpush1.bf16.msra.mxu0 %v1083
    %1150 = vmatprep.subr.bf16.mxu0 0
    %1151 = vmatpush1.bf16.msra.mxu0 %v1084
    %1152 = vmatprep.subr.bf16.mxu0 0
    %1153 = vmatpush1.bf16.msra.mxu0 %v1085
    %1154 = vmatprep.subr.bf16.mxu0 0
    %1155 = vmatpush1.bf16.msra.mxu0 %v1086
    %1156 = vmatprep.subr.bf16.mxu0 0
    %1157 = vmatpush1.bf16.msra.mxu0 %v1087
    %1158 = vmatprep.subr.bf16.mxu0 0
    %1159 = vmatpush1.bf16.msra.mxu0 %v1088
    %1160 = vmatprep.subr.bf16.mxu0 0
    %1161 = vmatpush1.bf16.msra.mxu0 %v1089
    %1162 = vmatprep.subr.bf16.mxu0 0
    %1163 = vmatpush1.bf16.msra.mxu0 %v1090
    %1164 = vmatprep.subr.bf16.mxu0 0
    %1165 = vmatpush1.bf16.msra.mxu0 %v1091
    %1166 = vmatprep.subr.bf16.mxu0 0
    %1167 = vmatpush1.bf16.msra.mxu0 %v1092
    %1168 = vmatprep.subr.bf16.mxu0 0
    %1169 = vmatpush1.bf16.msra.mxu0 %v1093
    %1170 = vmatprep.subr.bf16.mxu0 0
    %1171 = vmatpush1.bf16.msra.mxu0 %v1094
    %1172 = vmatprep.subr.bf16.mxu0 0
    %1173 = vmatpush1.bf16.msra.mxu0 %v1095
    %1174 = vmatprep.subr.bf16.mxu0 0
    %1175 = vmatpush1.bf16.msra.mxu0 %v1096
    %1176 = vmatprep.subr.bf16.mxu0 0
    %1177 = vmatpush1.bf16.msra.mxu0 %v1097
    %1178 = vmatprep.mubr.bf16.mxu0 %v880
    %1179 = vmatmul.mubr.bf16.gmra.mrb[0].mxu0 %v879
    %v1180 = vpop.f32.mrb[0].mxu0
    %v1181 = vadd.f32 %v952, %v1180
    %v1182 = vpop.f32.mrb[0].mxu0
    %v1183 = vpop.f32.mrb[0].mxu0
    %v1184 = vpop.f32.mrb[0].mxu0
    %1185 = vdwg.mxu0
    %1186 = vmatprep.subr.bf16.mxu0 0
    %1187 = vmatpush1.bf16.msra.mxu0 %v1098
    %1188 = vmatprep.subr.bf16.mxu0 0
    %1189 = vmatpush1.bf16.msra.mxu0 %v1099
    %1190 = vmatprep.subr.bf16.mxu0 0
    %1191 = vmatpush1.bf16.msra.mxu0 %v1100
    %1192 = vmatprep.subr.bf16.mxu0 0
    %1193 = vmatpush1.bf16.msra.mxu0 %v1101
    %1194 = vmatprep.subr.bf16.mxu0 0
    %1195 = vmatpush1.bf16.msra.mxu0 %v1102
    %1196 = vmatprep.subr.bf16.mxu0 0
    %1197 = vmatpush1.bf16.msra.mxu0 %v1103
    %1198 = vmatprep.subr.bf16.mxu0 0
    %1199 = vmatpush1.bf16.msra.mxu0 %v1104
    %1200 = vmatprep.subr.bf16.mxu0 0
    %1201 = vmatpush1.bf16.msra.mxu0 %v1105
    %1202 = vmatprep.subr.bf16.mxu0 0
    %1203 = vmatpush1.bf16.msra.mxu0 %v1106
    %1204 = vmatprep.subr.bf16.mxu0 0
    %1205 = vmatpush1.bf16.msra.mxu0 %v1107
    %1206 = vmatprep.subr.bf16.mxu0 0
    %1207 = vmatpush1.bf16.msra.mxu0 %v1108
    %1208 = vmatprep.subr.bf16.mxu0 0
    %1209 = vmatpush1.bf16.msra.mxu0 %v1109
    %1210 = vmatprep.subr.bf16.mxu0 0
    %1211 = vmatpush1.bf16.msra.mxu0 %v1110
    %1212 = vmatprep.subr.bf16.mxu0 0
    %1213 = vmatpush1.bf16.msra.mxu0 %v1111
    %1214 = vmatprep.subr.bf16.mxu0 0
    %1215 = vmatpush1.bf16.msra.mxu0 %v1112
    %1216 = vmatprep.subr.bf16.mxu0 0
    %1217 = vmatpush1.bf16.msra.mxu0 %v1113
    %1218 = vmatprep.mubr.bf16.mxu0 %v882
    %1219 = vmatmul.mubr.bf16.gmra.mrb[0].mxu0 %v881
    %v1220 = vpop.f32.mrb[0].mxu0
    %v1221 = vadd.f32 %v1181, %v1220
    %v1222 = vpop.f32.mrb[0].mxu0
    %v1223 = vpop.f32.mrb[0].mxu0
    %v1224 = vpop.f32.mrb[0].mxu0
    %1225 = vdwg.mxu0
    %v1226 = vmax.f32 %v1221, 0.0
    %v1227 = vpack.c.bf16 %v1226, %v1226
    %v1228 = vld [vmem:[#allocation11] sm:$0xf]
    %v1229 = vld [vmem:[#allocation11 + $0x4] sm:$0xf]
    %v1230 = vld [vmem:[#allocation11 + $0x8] sm:$0xf]
    %v1231 = vld [vmem:[#allocation11 + $0xc] sm:$0xf]
    %v1232 = vld [vmem:[#allocation11 + $0x10] sm:$0xf]
    %v1233 = vld [vmem:[#allocation11 + $0x14] sm:$0xf]
    %v1234 = vld [vmem:[#allocation11 + $0x18] sm:$0xf]
    %v1235 = vld [vmem:[#allocation11 + $0x1c] sm:$0xf]
    %v1236 = vld [vmem:[#allocation11 + $0x20] sm:$0xf]
    %v1237 = vld [vmem:[#allocation11 + $0x24] sm:$0xf]
    %v1238 = vld [vmem:[#allocation11 + $0x28] sm:$0xf]
    %v1239 = vld [vmem:[#allocation11 + $0x2c] sm:$0xf]
    %v1240 = vld [vmem:[#allocation11 + $0x30] sm:$0xf]
    %v1241 = vld [vmem:[#allocation11 + $0x34] sm:$0xf]
    %v1242 = vld [vmem:[#allocation11 + $0x38] sm:$0xf]
    %v1243 = vld [vmem:[#allocation11 + $0x3c] sm:$0xf]
    %v1244 = vld [vmem:[%s10] sm:$0x1]
    %v1246 = vlaneseq
    %v1247 = vshrl.u32 %v1246, 7
    %v1248 = vsub.s32 0, %v1247
    %v1249 = vrot.slane %v1244, %v1248
    %v1267 = vunpack.c.l.b16 %v1228
    %v1268 = vunpack.c.l.b16 %v1229
    %v1269 = vunpack.c.l.b16 %v1230
    %v1270 = vunpack.c.l.b16 %v1231
    %v1271 = vunpack.c.l.b16 %v1232
    %v1272 = vunpack.c.l.b16 %v1233
    %v1273 = vunpack.c.l.b16 %v1234
    %v1274 = vunpack.c.l.b16 %v1235
    %v1275 = vunpack.c.l.b16 %v1236
    %v1276 = vunpack.c.l.b16 %v1237
    %v1277 = vunpack.c.l.b16 %v1238
    %v1278 = vunpack.c.l.b16 %v1239
    %v1279 = vunpack.c.l.b16 %v1240
    %v1280 = vunpack.c.l.b16 %v1241
    %v1281 = vunpack.c.l.b16 %v1242
    %v1282 = vunpack.c.l.b16 %v1243
    %v1283 = vpack.c.b16 %v1268, %v1267
    %v1284 = vpack.c.b16 %v1270, %v1269
    %v1285 = vpack.c.b16 %v1272, %v1271
    %v1286 = vpack.c.b16 %v1274, %v1273
    %v1287 = vpack.c.b16 %v1276, %v1275
    %v1288 = vpack.c.b16 %v1278, %v1277
    %v1289 = vpack.c.b16 %v1280, %v1279
    %v1290 = vpack.c.b16 %v1282, %v1281
    %1299 = vmatprep.subr.bf16.mxu0 0
    %1300 = vmatpush1.bf16.msra.mxu0 %v1283
    %1301 = vmatprep.subr.bf16.mxu0 0
    %1302 = vmatpush1.bf16.msra.mxu0 %v1284
    %1303 = vmatprep.subr.bf16.mxu0 0
    %1304 = vmatpush1.bf16.msra.mxu0 %v1285
    %1305 = vmatprep.subr.bf16.mxu0 0
    %1306 = vmatpush1.bf16.msra.mxu0 %v1286
    %1307 = vmatprep.subr.bf16.mxu0 0
    %1308 = vmatpush1.bf16.msra.mxu0 %v1287
    %1309 = vmatprep.subr.bf16.mxu0 0
    %1310 = vmatpush1.bf16.msra.mxu0 %v1288
    %1311 = vmatprep.subr.bf16.mxu0 0
    %1312 = vmatpush1.bf16.msra.mxu0 %v1289
    %1313 = vmatprep.subr.bf16.mxu0 0
    %1314 = vmatpush1.bf16.msra.mxu0 %v1290
    %1315 = vmatprep.subr.bf16.mxu0 0
    %1316 = vmatpush1.bf16.msra.mxu0 0
    %1317 = vmatprep.subr.bf16.mxu0 0
    %1318 = vmatpush1.bf16.msra.mxu0 0
    %1319 = vmatprep.subr.bf16.mxu0 0
    %1320 = vmatpush1.bf16.msra.mxu0 0
    %1321 = vmatprep.subr.bf16.mxu0 0
    %1322 = vmatpush1.bf16.msra.mxu0 0
    %1323 = vmatprep.subr.bf16.mxu0 0
    %1324 = vmatpush1.bf16.msra.mxu0 0
    %1325 = vmatprep.subr.bf16.mxu0 0
    %1326 = vmatpush1.bf16.msra.mxu0 0
    %1327 = vmatprep.subr.bf16.mxu0 0
    %1328 = vmatpush1.bf16.msra.mxu0 0
    %1329 = vmatprep.subr.bf16.mxu0 0
    %1330 = vmatpush1.bf16.msra.mxu0 0
    %1331 = vmatprep.mubr.bf16.mxu0 0
    %1332 = vmatmul.mubr.bf16.gmra.mrb[0].mxu0 %v1227
    %v1333 = vpop.f32.mrb[0].mxu0
    %v1334 = vadd.f32 %v1249, %v1333
    %v1335 = vpop.f32.mrb[0].mxu0
    %v1336 = vpop.f32.mrb[0].mxu0
    %v1337 = vpop.f32.mrb[0].mxu0
    %1338 = vdwg.mxu0
    %v1339 = vpack.c.bf16 %v1334, %v1334
    %1340 = vst [vmem:[#allocation13] sm:$0xf] %v1339
    // Predicated region
    $region70: #{tpu_custom_call.1} parent=1 // pred_check
      _
    $region71: #{tpu_custom_call.1} parent=1 // pred_check_branch
      %1342 = sbr.rel (0) target = $region73
    $region72: #{tpu_custom_call.1} parent=1 // pred_region
      %s1344 = ssub.s32 64, 64
      %1345 = vsyncadd [#allocation4], %s1344
      %s1347 = sshll.u32 [#allocation13], 4
      %s1348 = int_to_ptr.vmem [resolvable:$true] %s1347
      %1350 = dma.vmem_to_hbm [thread:$0]  %s1348, 64, %s11, [#allocation4]
    $region73: #{tpu_custom_call.1} parent=1 // pred_fallthru
      _
    // Predicated region
    $region74: #{tpu_custom_call.1} parent=1 // pred_check
      _
    $region75: #{tpu_custom_call.1} parent=1 // pred_check_branch
      %1352 = sbr.rel (0) target = $region77
    $region76: #{tpu_custom_call.1} parent=1 // pred_region
      %1353 = dma.done [#allocation4], 64
    $region77: #{tpu_custom_call.1} parent=1 // pred_fallthru
      _
    %1354 = vsyncpa [#allocation3], 1
    %1355 = vsyncpa [#allocation6], 1
    %1356 = vsyncpa [#allocation9], 1
    %1357 = vsyncpa [#allocation12], 1
    %1358 = vsyncpa [#allocation4], 1

</llo_original>
